<compile_context>
chip_gen: v7x
topology: tpu7x:2x2x1
jax: 0.10.0
libtpu: 0.0.40
codegen_flags: <defaults>
</compile_context>

<pallas_src>
import jax
import jax.numpy as jnp
from jax.experimental import pallas as pl
from jax.experimental.pallas import tpu as pltpu


def _extra_model_kernel(x_ref, side_ref,
                        w_fc1_ref, b_fc1_ref,
                        t_emb_ref,
                        w_ex1_ref, b_ex1_ref,
                        w_e1_ref, w_e2_ref, b_e_ref,
                        w_mx_ref, w_me_ref, b_m_ref,
                        w_last_ref, b_last_ref,
                        out_ref):
    f32 = jnp.float32
    bf16 = jnp.bfloat16

    # NOTE: when B % tb != 0 the padded tail rows carry garbage idx/s1/s2.
    # This is safe: only one-hot compares, linear maps and relus below (no
    # exp/div -> no NaN/Inf), and padded output rows are clipped on writeback.
    # Do not add exp/div on these paths without masking.
    x = x_ref[...]                                    # (tb, d_in) bf16
    side = side_ref[...]                              # (tb, 3) f32: [idx, s1, s2]
    idx = side[:, 0:1].astype(jnp.int32)              # exact for vocab < 2^24
    s1 = side[:, 1:2]
    s2 = side[:, 2:3]

    # --- base_model (fc2 replaced by Noop): h = relu(x @ W1^T + b1) ----------
    h = jnp.dot(x, w_fc1_ref[...], preferred_element_type=f32)
    h = jnp.maximum(h + b_fc1_ref[...], 0.0)          # (tb, in_last) f32

    # --- extra_layers0 folded with extra_linear's first slice:
    #     relu(Embedding(idx)) @ W_e0^T == onehot(idx) @ T,
    #     T = relu(emb_table) @ W_e0^T precomputed in the wrapper (exact). ----
    vocab = t_emb_ref.shape[0]
    iota = jax.lax.broadcasted_iota(jnp.int32, (idx.shape[0], vocab), 1)
    onehot = jnp.where(iota == idx, 1.0, 0.0).astype(bf16)
    em0 = jnp.dot(onehot, t_emb_ref[...], preferred_element_type=f32)   # (tb, mid)

    # --- extra_layers1: NoopAddDim -> Linear(1, l1) -> ReLU (elementwise) ----
    e1 = jnp.maximum(s1 * w_ex1_ref[...] + b_ex1_ref[...], 0.0)         # (tb, l1)

    # --- extra_layers2: NoopAddDim -> ReLU ------------------------------------
    e2 = jnp.maximum(s2, 0.0)                                           # (tb, 1)

    # --- extra_linear over concat([e0, e1, e2]) (decomposed) -> ReLU ---------
    em = (em0
          + jnp.dot(e1.astype(bf16), w_e1_ref[...], preferred_element_type=f32)
          + e2 * w_e2_ref[...]
          + b_e_ref[...])
    em = jnp.maximum(em, 0.0)                                           # (tb, mid)

    # --- mlps[0]: Linear over concat([h, em]) (decomposed) -> ReLU -----------
    m = (jnp.dot(h.astype(bf16), w_mx_ref[...], preferred_element_type=f32)
         + jnp.dot(em.astype(bf16), w_me_ref[...], preferred_element_type=f32)
         + b_m_ref[...])
    m = jnp.maximum(m, 0.0)                                             # (tb, m_out)

    # --- last_linear (output padded to lane-dense 128 columns) ---------------
    out = (jnp.dot(m.astype(bf16), w_last_ref[...], preferred_element_type=f32)
           + b_last_ref[...])
    out_ref[...] = out.astype(out_ref.dtype)


def _round_up(v, m):
    return ((v + m - 1) // m) * m


def _choose_tb(B, batch_block):
    """Batch tile: big enough to amortize the ~0.35us per-step overhead, a
    multiple of 16 (bf16 sublane packing), and >=2 grid steps when B allows so
    the 'parallel' batch axis spans both TensorCores on v7x."""
    if B <= 16:
        return B                      # single tile equal to the full batch dim
    half = _round_up(pl.cdiv(B, 2), 16)
    return max(16, min(batch_block, half))


def extra_model_forward(params, x, extra0_idx, extra1, extra2, *, batch_block=1024):
    """Fused Pallas forward matching ExtraModel.forward (torch weight layout in)."""
    B, d_in = x.shape
    f32, bf16 = jnp.float32, jnp.bfloat16
    hp = jax.lax.Precision.HIGHEST

    fc1_w, fc1_b = params["fc1_w"], params["fc1_b"]
    emb0 = params["emb0"]
    ex1_w, ex1_b = params["ex1_w"], params["ex1_b"]
    elin_w, elin_b = params["elin_w"], params["elin_b"]
    mlp_w, mlp_b = params["mlp_w"], params["mlp_b"]
    last_w, last_b = params["last_w"], params["last_b"]

    in_last = fc1_w.shape[0]
    vocab, e_dim = emb0.shape
    l1 = ex1_w.shape[0]
    mid = elin_w.shape[0]
    m_out = mlp_w.shape[0]
    out_last = last_w.shape[0]
    out_pad = _round_up(out_last, 128)        # lane-dense output store

    # ---- metadata-only prep in the wrapper (no Pallas kernels) --------------
    # Pack the three per-row scalars into one (B, 3) array -> one DMA per step.
    side = jnp.stack([extra0_idx.astype(f32),
                      extra1.astype(f32),
                      extra2.astype(f32)], axis=1)                       # (B, 3)
    x_bf = x.astype(bf16)

    w_fc1_t = fc1_w.T.astype(bf16)                                       # (d_in, in_last)
    b_fc1 = fc1_b.reshape(1, in_last).astype(f32)
    # Fold relu(embedding table) into extra_linear's first slice (exact rewrite).
    t_emb = jnp.dot(jnp.maximum(emb0, 0.0), elin_w[:, :e_dim].T,
                    precision=hp).astype(bf16)                           # (vocab, mid)
    w_ex1_t = ex1_w.T.astype(f32)                                        # (1, l1) elementwise
    b_ex1 = ex1_b.reshape(1, l1).astype(f32)
    w_e1_t = elin_w[:, e_dim:e_dim + l1].T.astype(bf16)                  # (l1, mid)
    w_e2_t = elin_w[:, e_dim + l1:].T.astype(f32)                        # (1, mid) elementwise
    b_e = elin_b.reshape(1, mid).astype(f32)
    w_mx_t = mlp_w[:, :in_last].T.astype(bf16)                           # (in_last, m_out)
    w_me_t = mlp_w[:, in_last:].T.astype(bf16)                           # (mid, m_out)
    b_m = mlp_b.reshape(1, m_out).astype(f32)
    w_last_t = jnp.zeros((m_out, out_pad), bf16).at[:, :out_last].set(
        last_w.T.astype(bf16))                                           # (m_out, out_pad)
    b_last = jnp.zeros((1, out_pad), f32).at[:, :out_last].set(
        last_b.reshape(1, out_last).astype(f32))

    tb = _choose_tb(B, batch_block)
    grid = (pl.cdiv(B, tb),)

    def batch_spec(shape):
        nd = len(shape)
        return pl.BlockSpec((tb,) + tuple(shape[1:]),
                            lambda i: (i,) + (0,) * (nd - 1))

    def full_spec(shape):
        nd = len(shape)
        # Constant index_map -> the weight is DMA'd once and stays VMEM-resident.
        # (pipeline_mode=pl.Buffered(1) would drop the unused second buffer but
        #  is omitted for portability; the weights total < 50 KB anyway.)
        return pl.BlockSpec(tuple(shape), lambda i: (0,) * nd)

    weight_arrays = [w_fc1_t, b_fc1, t_emb, w_ex1_t, b_ex1,
                     w_e1_t, w_e2_t, b_e,
                     w_mx_t, w_me_t, b_m, w_last_t, b_last]

    in_specs = ([batch_spec(x_bf.shape), batch_spec(side.shape)]
                + [full_spec(w.shape) for w in weight_arrays])

    flops = 2 * B * (d_in * in_last + vocab * mid + l1 * mid
                     + in_last * m_out + mid * m_out + m_out * out_pad)
    bytes_accessed = int(sum(a.size * a.dtype.itemsize
                             for a in [x_bf, side] + weight_arrays)
                         + B * out_pad * 4)

    out_padded = pl.pallas_call(
        _extra_model_kernel,
        out_shape=jax.ShapeDtypeStruct((B, out_pad), jnp.float32),
        grid=grid,
        in_specs=in_specs,
        out_specs=pl.BlockSpec((tb, out_pad), lambda i: (i, 0)),
        compiler_params=pltpu.CompilerParams(
            dimension_semantics=("parallel",)),
        cost_estimate=pl.CostEstimate(flops=flops, transcendentals=0,
                                      bytes_accessed=bytes_accessed),
    )(x_bf, side, *weight_arrays)

    return out_padded[:, :out_last]


def extra_model_reference(params, x, extra0_idx, extra1, extra2):
    """Pure-JAX reference with the exact PyTorch forward semantics (f32, HIGHEST)."""
    hp = jax.lax.Precision.HIGHEST
    h = jnp.maximum(jnp.dot(x, params["fc1_w"].T, precision=hp) + params["fc1_b"], 0.0)
    e0 = jnp.maximum(params["emb0"][extra0_idx], 0.0)
    e1 = jnp.maximum(jnp.dot(extra1[:, None], params["ex1_w"].T, precision=hp)
                     + params["ex1_b"], 0.0)
    e2 = jnp.maximum(extra2[:, None], 0.0)
    extra = jnp.concatenate([e0, e1, e2], axis=1)
    em = jnp.maximum(jnp.dot(extra, params["elin_w"].T, precision=hp)
                     + params["elin_b"], 0.0)
    xx = jnp.concatenate([h, em], axis=1)
    m = jnp.maximum(jnp.dot(xx, params["mlp_w"].T, precision=hp) + params["mlp_b"], 0.0)
    return jnp.dot(m, params["last_w"].T, precision=hp) + params["last_b"]


if __name__ == "__main__":
    key = jax.random.PRNGKey(0)
    # B=64 -> tb=32, a 2-step "parallel" grid (exercises tiling + both v7x TCs).
    B, D_IN, IN_LAST, OUT_LAST = 64, 32, 128, 8
    VOCAB, E_DIM, L1, MID, M_OUT = 16, 16, 15, 32, 64
    keys = jax.random.split(key, 16)

    def lin(k, out_d, in_d):
        return jax.random.normal(k, (out_d, in_d), jnp.float32) / jnp.sqrt(in_d)

    params = {
        "fc1_w": lin(keys[0], IN_LAST, D_IN),
        "fc1_b": 0.1 * jax.random.normal(keys[1], (IN_LAST,), jnp.float32),
        "emb0": jax.random.normal(keys[2], (VOCAB, E_DIM), jnp.float32),
        "ex1_w": lin(keys[3], L1, 1),
        "ex1_b": 0.1 * jax.random.normal(keys[4], (L1,), jnp.float32),
        "elin_w": lin(keys[5], MID, E_DIM + L1 + 1),
        "elin_b": 0.1 * jax.random.normal(keys[6], (MID,), jnp.float32),
        "mlp_w": lin(keys[7], M_OUT, IN_LAST + MID),
        "mlp_b": 0.1 * jax.random.normal(keys[8], (M_OUT,), jnp.float32),
        "last_w": lin(keys[9], OUT_LAST, M_OUT),
        "last_b": 0.1 * jax.random.normal(keys[10], (OUT_LAST,), jnp.float32),
    }

    x = jax.random.normal(keys[11], (B, D_IN), jnp.float32)
    extra0_idx = jax.random.randint(keys[12], (B,), 0, VOCAB, dtype=jnp.int32)
    extra1 = jax.random.normal(keys[13], (B,), jnp.float32)
    extra2 = jax.random.normal(keys[14], (B,), jnp.float32)

    out = extra_model_forward(params, x, extra0_idx, extra1, extra2)
    out = jax.block_until_ready(out)

    ref = extra_model_reference(params, x, extra0_idx, extra1, extra2)
    assert out.shape == ref.shape == (B, OUT_LAST), (out.shape, ref.shape)
    assert out.dtype == jnp.float32
    # bf16 MXU operands (per perf review) vs f32-HIGHEST reference -> 2e-2 tol.
    assert bool(jnp.allclose(out, ref, rtol=2e-2, atol=2e-2)), \
        float(jnp.max(jnp.abs(out - ref)))

    print("KERNEL_OK")
</pallas_src>

<mosaic_0001>
module attributes {stable_mosaic.version = 11 : i64} {
  func.func @_extra_model_kernel(%arg0: i32, %arg1: memref<32x32xbf16, #tpu.memory_space<vmem>>, %arg2: memref<32x3xf32, #tpu.memory_space<vmem>>, %arg3: memref<32x128xbf16, #tpu.memory_space<vmem>>, %arg4: memref<1x128xf32, #tpu.memory_space<vmem>>, %arg5: memref<16x32xbf16, #tpu.memory_space<vmem>>, %arg6: memref<1x15xf32, #tpu.memory_space<vmem>>, %arg7: memref<1x15xf32, #tpu.memory_space<vmem>>, %arg8: memref<15x32xbf16, #tpu.memory_space<vmem>>, %arg9: memref<1x32xf32, #tpu.memory_space<vmem>>, %arg10: memref<1x32xf32, #tpu.memory_space<vmem>>, %arg11: memref<128x64xbf16, #tpu.memory_space<vmem>>, %arg12: memref<32x64xbf16, #tpu.memory_space<vmem>>, %arg13: memref<1x64xf32, #tpu.memory_space<vmem>>, %arg14: memref<64x128xbf16, #tpu.memory_space<vmem>>, %arg15: memref<1x128xf32, #tpu.memory_space<vmem>>, %arg16: memref<32x128xf32, #tpu.memory_space<vmem>>) attributes {dimension_semantics = [#tpu.dimension_semantics<parallel>], iteration_bounds = array<i64: 2>, scalar_prefetch = 0 : i64, scratch_operands = 0 : i64, tpu.core_type = #tpu.core_type<tc>, window_params = [{transform_indices = @transform_0, window_bounds = array<i64: 32, 32>}, {transform_indices = @transform_1, window_bounds = array<i64: 32, 3>}, {pipeline_mode = #tpu.pipeline_mode<synchronous>, transform_indices = @transform_2, window_bounds = array<i64: 32, 128>}, {pipeline_mode = #tpu.pipeline_mode<synchronous>, transform_indices = @transform_3, window_bounds = array<i64: 1, 128>}, {pipeline_mode = #tpu.pipeline_mode<synchronous>, transform_indices = @transform_4, window_bounds = array<i64: 16, 32>}, {pipeline_mode = #tpu.pipeline_mode<synchronous>, transform_indices = @transform_5, window_bounds = array<i64: 1, 15>}, {pipeline_mode = #tpu.pipeline_mode<synchronous>, transform_indices = @transform_6, window_bounds = array<i64: 1, 15>}, {pipeline_mode = #tpu.pipeline_mode<synchronous>, transform_indices = @transform_7, window_bounds = array<i64: 15, 32>}, {pipeline_mode = #tpu.pipeline_mode<synchronous>, transform_indices = @transform_8, window_bounds = array<i64: 1, 32>}, {pipeline_mode = #tpu.pipeline_mode<synchronous>, transform_indices = @transform_9, window_bounds = array<i64: 1, 32>}, {pipeline_mode = #tpu.pipeline_mode<synchronous>, transform_indices = @transform_10, window_bounds = array<i64: 128, 64>}, {pipeline_mode = #tpu.pipeline_mode<synchronous>, transform_indices = @transform_11, window_bounds = array<i64: 32, 64>}, {pipeline_mode = #tpu.pipeline_mode<synchronous>, transform_indices = @transform_12, window_bounds = array<i64: 1, 64>}, {pipeline_mode = #tpu.pipeline_mode<synchronous>, transform_indices = @transform_13, window_bounds = array<i64: 64, 128>}, {pipeline_mode = #tpu.pipeline_mode<synchronous>, transform_indices = @transform_14, window_bounds = array<i64: 1, 128>}, {transform_indices = @transform_15, window_bounds = array<i64: 32, 128>}]} {
    %c0 = arith.constant 0 : index
    %c0_0 = arith.constant 0 : index
    %0 = vector.load %arg1[%c0, %c0_0] : memref<32x32xbf16, #tpu.memory_space<vmem>>, vector<32x32xbf16>
    %c0_1 = arith.constant 0 : index
    %c0_2 = arith.constant 0 : index
    %1 = vector.load %arg2[%c0_1, %c0_2] : memref<32x3xf32, #tpu.memory_space<vmem>>, vector<32x3xf32>
    %2 = vector.extract_strided_slice %1 {offsets = [0, 0], sizes = [32, 1], strides = [1, 1]} : vector<32x3xf32> to vector<32x1xf32>
    %3 = arith.fptosi %2 : vector<32x1xf32> to vector<32x1xi32>
    %4 = vector.extract_strided_slice %1 {offsets = [0, 1], sizes = [32, 1], strides = [1, 1]} : vector<32x3xf32> to vector<32x1xf32>
    %5 = vector.extract_strided_slice %1 {offsets = [0, 2], sizes = [32, 1], strides = [1, 1]} : vector<32x3xf32> to vector<32x1xf32>
    %c0_3 = arith.constant 0 : index
    %c0_4 = arith.constant 0 : index
    %6 = vector.load %arg3[%c0_3, %c0_4] : memref<32x128xbf16, #tpu.memory_space<vmem>>, vector<32x128xbf16>
    %cst = arith.constant dense<0.000000e+00> : vector<32x128xf32>
    %7 = tpu.matmul %0, %6, %cst {dimension_numbers = #tpu.dot_dimension_numbers<[1], [0], [0], [1], [0, 0, 1, 1], [], []>} : vector<32x32xbf16>, vector<32x128xbf16>, vector<32x128xf32> -> vector<32x128xf32>
    %c0_5 = arith.constant 0 : index
    %c0_6 = arith.constant 0 : index
    %8 = vector.load %arg4[%c0_5, %c0_6] : memref<1x128xf32, #tpu.memory_space<vmem>>, vector<1x128xf32>
    %9 = vector.broadcast %8 : vector<1x128xf32> to vector<32x128xf32>
    %10 = arith.addf %7, %9 : vector<32x128xf32>
    %cst_7 = arith.constant 0.000000e+00 : f32
    %11 = vector.broadcast %cst_7 : f32 to vector<32x128xf32>
    %12 = arith.maximumf %10, %11 : vector<32x128xf32>
    %13 = tpu.iota {dimensions = array<i32: 1>} : vector<32x16xi32>
    %14 = vector.broadcast %3 : vector<32x1xi32> to vector<32x16xi32>
    %15 = arith.cmpi eq, %13, %14 : vector<32x16xi32>
    %cst_8 = arith.constant 1.000000e+00 : f32
    %cst_9 = arith.constant 0.000000e+00 : f32
    %16 = vector.broadcast %cst_8 : f32 to vector<32x16xf32>
    %17 = vector.broadcast %cst_9 : f32 to vector<32x16xf32>
    %18 = arith.select %15, %16, %17 : vector<32x16xi1>, vector<32x16xf32>
    %19 = arith.truncf %18 : vector<32x16xf32> to vector<32x16xbf16>
    %c0_10 = arith.constant 0 : index
    %c0_11 = arith.constant 0 : index
    %20 = vector.load %arg5[%c0_10, %c0_11] : memref<16x32xbf16, #tpu.memory_space<vmem>>, vector<16x32xbf16>
    %cst_12 = arith.constant dense<0.000000e+00> : vector<32x32xf32>
    %21 = tpu.matmul %19, %20, %cst_12 {dimension_numbers = #tpu.dot_dimension_numbers<[1], [0], [0], [1], [0, 0, 1, 1], [], []>} : vector<32x16xbf16>, vector<16x32xbf16>, vector<32x32xf32> -> vector<32x32xf32>
    %c0_13 = arith.constant 0 : index
    %c0_14 = arith.constant 0 : index
    %22 = vector.load %arg6[%c0_13, %c0_14] : memref<1x15xf32, #tpu.memory_space<vmem>>, vector<1x15xf32>
    %23 = vector.broadcast %4 : vector<32x1xf32> to vector<32x15xf32>
    %24 = vector.broadcast %22 : vector<1x15xf32> to vector<32x15xf32>
    %25 = arith.mulf %23, %24 : vector<32x15xf32>
    %c0_15 = arith.constant 0 : index
    %c0_16 = arith.constant 0 : index
    %26 = vector.load %arg7[%c0_15, %c0_16] : memref<1x15xf32, #tpu.memory_space<vmem>>, vector<1x15xf32>
    %27 = vector.broadcast %26 : vector<1x15xf32> to vector<32x15xf32>
    %28 = arith.addf %25, %27 : vector<32x15xf32>
    %cst_17 = arith.constant 0.000000e+00 : f32
    %29 = vector.broadcast %cst_17 : f32 to vector<32x15xf32>
    %30 = arith.maximumf %28, %29 : vector<32x15xf32>
    %cst_18 = arith.constant 0.000000e+00 : f32
    %31 = vector.broadcast %cst_18 : f32 to vector<32x1xf32>
    %32 = arith.maximumf %5, %31 : vector<32x1xf32>
    %33 = arith.truncf %30 : vector<32x15xf32> to vector<32x15xbf16>
    %c0_19 = arith.constant 0 : index
    %c0_20 = arith.constant 0 : index
    %34 = vector.load %arg8[%c0_19, %c0_20] : memref<15x32xbf16, #tpu.memory_space<vmem>>, vector<15x32xbf16>
    %cst_21 = arith.constant dense<0.000000e+00> : vector<32x32xf32>
    %35 = tpu.matmul %33, %34, %cst_21 {dimension_numbers = #tpu.dot_dimension_numbers<[1], [0], [0], [1], [0, 0, 1, 1], [], []>} : vector<32x15xbf16>, vector<15x32xbf16>, vector<32x32xf32> -> vector<32x32xf32>
    %36 = arith.addf %21, %35 : vector<32x32xf32>
    %c0_22 = arith.constant 0 : index
    %c0_23 = arith.constant 0 : index
    %37 = vector.load %arg9[%c0_22, %c0_23] : memref<1x32xf32, #tpu.memory_space<vmem>>, vector<1x32xf32>
    %38 = vector.broadcast %32 : vector<32x1xf32> to vector<32x32xf32>
    %39 = vector.broadcast %37 : vector<1x32xf32> to vector<32x32xf32>
    %40 = arith.mulf %38, %39 : vector<32x32xf32>
    %41 = arith.addf %36, %40 : vector<32x32xf32>
    %c0_24 = arith.constant 0 : index
    %c0_25 = arith.constant 0 : index
    %42 = vector.load %arg10[%c0_24, %c0_25] : memref<1x32xf32, #tpu.memory_space<vmem>>, vector<1x32xf32>
    %43 = vector.broadcast %42 : vector<1x32xf32> to vector<32x32xf32>
    %44 = arith.addf %41, %43 : vector<32x32xf32>
    %cst_26 = arith.constant 0.000000e+00 : f32
    %45 = vector.broadcast %cst_26 : f32 to vector<32x32xf32>
    %46 = arith.maximumf %44, %45 : vector<32x32xf32>
    %47 = arith.truncf %12 : vector<32x128xf32> to vector<32x128xbf16>
    %c0_27 = arith.constant 0 : index
    %c0_28 = arith.constant 0 : index
    %48 = vector.load %arg11[%c0_27, %c0_28] : memref<128x64xbf16, #tpu.memory_space<vmem>>, vector<128x64xbf16>
    %cst_29 = arith.constant dense<0.000000e+00> : vector<32x64xf32>
    %49 = tpu.matmul %47, %48, %cst_29 {dimension_numbers = #tpu.dot_dimension_numbers<[1], [0], [0], [1], [0, 0, 1, 1], [], []>} : vector<32x128xbf16>, vector<128x64xbf16>, vector<32x64xf32> -> vector<32x64xf32>
    %50 = arith.truncf %46 : vector<32x32xf32> to vector<32x32xbf16>
    %c0_30 = arith.constant 0 : index
    %c0_31 = arith.constant 0 : index
    %51 = vector.load %arg12[%c0_30, %c0_31] : memref<32x64xbf16, #tpu.memory_space<vmem>>, vector<32x64xbf16>
    %cst_32 = arith.constant dense<0.000000e+00> : vector<32x64xf32>
    %52 = tpu.matmul %50, %51, %cst_32 {dimension_numbers = #tpu.dot_dimension_numbers<[1], [0], [0], [1], [0, 0, 1, 1], [], []>} : vector<32x32xbf16>, vector<32x64xbf16>, vector<32x64xf32> -> vector<32x64xf32>
    %53 = arith.addf %49, %52 : vector<32x64xf32>
    %c0_33 = arith.constant 0 : index
    %c0_34 = arith.constant 0 : index
    %54 = vector.load %arg13[%c0_33, %c0_34] : memref<1x64xf32, #tpu.memory_space<vmem>>, vector<1x64xf32>
    %55 = vector.broadcast %54 : vector<1x64xf32> to vector<32x64xf32>
    %56 = arith.addf %53, %55 : vector<32x64xf32>
    %cst_35 = arith.constant 0.000000e+00 : f32
    %57 = vector.broadcast %cst_35 : f32 to vector<32x64xf32>
    %58 = arith.maximumf %56, %57 : vector<32x64xf32>
    %59 = arith.truncf %58 : vector<32x64xf32> to vector<32x64xbf16>
    %c0_36 = arith.constant 0 : index
    %c0_37 = arith.constant 0 : index
    %60 = vector.load %arg14[%c0_36, %c0_37] : memref<64x128xbf16, #tpu.memory_space<vmem>>, vector<64x128xbf16>
    %cst_38 = arith.constant dense<0.000000e+00> : vector<32x128xf32>
    %61 = tpu.matmul %59, %60, %cst_38 {dimension_numbers = #tpu.dot_dimension_numbers<[1], [0], [0], [1], [0, 0, 1, 1], [], []>} : vector<32x64xbf16>, vector<64x128xbf16>, vector<32x128xf32> -> vector<32x128xf32>
    %c0_39 = arith.constant 0 : index
    %c0_40 = arith.constant 0 : index
    %62 = vector.load %arg15[%c0_39, %c0_40] : memref<1x128xf32, #tpu.memory_space<vmem>>, vector<1x128xf32>
    %63 = vector.broadcast %62 : vector<1x128xf32> to vector<32x128xf32>
    %64 = arith.addf %61, %63 : vector<32x128xf32>
    %c0_41 = arith.constant 0 : index
    %c0_42 = arith.constant 0 : index
    %65 = vector.load %arg16[%c0_41, %c0_42] : memref<32x128xf32, #tpu.memory_space<vmem>>, vector<32x128xf32>
    tpu.vector_store %arg16[%c0_41, %c0_42], %64 {strides = array<i32>} : memref<32x128xf32, #tpu.memory_space<vmem>>, vector<32x128xf32>,
    return
  }
  func.func @transform_0(%arg0: i32) -> (i32, i32) {
    %c0_i32 = arith.constant 0 : i32
    %c0_i32_0 = arith.constant 0 : i32
    return %arg0, %c0_i32 : i32, i32
  }
  func.func @transform_1(%arg0: i32) -> (i32, i32) {
    %c0_i32 = arith.constant 0 : i32
    %c0_i32_0 = arith.constant 0 : i32
    return %arg0, %c0_i32 : i32, i32
  }
  func.func @transform_2(%arg0: i32) -> (i32, i32) {
    %c0_i32 = arith.constant 0 : i32
    %c0_i32_0 = arith.constant 0 : i32
    %c0_i32_1 = arith.constant 0 : i32
    return %c0_i32, %c0_i32_0 : i32, i32
  }
  func.func @transform_3(%arg0: i32) -> (i32, i32) {
    %c0_i32 = arith.constant 0 : i32
    %c0_i32_0 = arith.constant 0 : i32
    %c0_i32_1 = arith.constant 0 : i32
    return %c0_i32, %c0_i32_0 : i32, i32
  }
  func.func @transform_4(%arg0: i32) -> (i32, i32) {
    %c0_i32 = arith.constant 0 : i32
    %c0_i32_0 = arith.constant 0 : i32
    %c0_i32_1 = arith.constant 0 : i32
    return %c0_i32, %c0_i32_0 : i32, i32
  }
  func.func @transform_5(%arg0: i32) -> (i32, i32) {
    %c0_i32 = arith.constant 0 : i32
    %c0_i32_0 = arith.constant 0 : i32
    %c0_i32_1 = arith.constant 0 : i32
    return %c0_i32, %c0_i32_0 : i32, i32
  }
  func.func @transform_6(%arg0: i32) -> (i32, i32) {
    %c0_i32 = arith.constant 0 : i32
    %c0_i32_0 = arith.constant 0 : i32
    %c0_i32_1 = arith.constant 0 : i32
    return %c0_i32, %c0_i32_0 : i32, i32
  }
  func.func @transform_7(%arg0: i32) -> (i32, i32) {
    %c0_i32 = arith.constant 0 : i32
    %c0_i32_0 = arith.constant 0 : i32
    %c0_i32_1 = arith.constant 0 : i32
    return %c0_i32, %c0_i32_0 : i32, i32
  }
  func.func @transform_8(%arg0: i32) -> (i32, i32) {
    %c0_i32 = arith.constant 0 : i32
    %c0_i32_0 = arith.constant 0 : i32
    %c0_i32_1 = arith.constant 0 : i32
    return %c0_i32, %c0_i32_0 : i32, i32
  }
  func.func @transform_9(%arg0: i32) -> (i32, i32) {
    %c0_i32 = arith.constant 0 : i32
    %c0_i32_0 = arith.constant 0 : i32
    %c0_i32_1 = arith.constant 0 : i32
    return %c0_i32, %c0_i32_0 : i32, i32
  }
  func.func @transform_10(%arg0: i32) -> (i32, i32) {
    %c0_i32 = arith.constant 0 : i32
    %c0_i32_0 = arith.constant 0 : i32
    %c0_i32_1 = arith.constant 0 : i32
    return %c0_i32, %c0_i32_0 : i32, i32
  }
  func.func @transform_11(%arg0: i32) -> (i32, i32) {
    %c0_i32 = arith.constant 0 : i32
    %c0_i32_0 = arith.constant 0 : i32
    %c0_i32_1 = arith.constant 0 : i32
    return %c0_i32, %c0_i32_0 : i32, i32
  }
  func.func @transform_12(%arg0: i32) -> (i32, i32) {
    %c0_i32 = arith.constant 0 : i32
    %c0_i32_0 = arith.constant 0 : i32
    %c0_i32_1 = arith.constant 0 : i32
    return %c0_i32, %c0_i32_0 : i32, i32
  }
  func.func @transform_13(%arg0: i32) -> (i32, i32) {
    %c0_i32 = arith.constant 0 : i32
    %c0_i32_0 = arith.constant 0 : i32
    %c0_i32_1 = arith.constant 0 : i32
    return %c0_i32, %c0_i32_0 : i32, i32
  }
  func.func @transform_14(%arg0: i32) -> (i32, i32) {
    %c0_i32 = arith.constant 0 : i32
    %c0_i32_0 = arith.constant 0 : i32
    %c0_i32_1 = arith.constant 0 : i32
    return %c0_i32, %c0_i32_0 : i32, i32
  }
  func.func @transform_15(%arg0: i32) -> (i32, i32) {
    %c0_i32 = arith.constant 0 : i32
    %c0_i32_0 = arith.constant 0 : i32
    return %arg0, %c0_i32 : i32, i32
  }
}

</mosaic_0001>

<llo_original>
// kernel: tpu_custom_call.1
$region0: #{tpu_custom_call.1}
  #allocation0 [shape = 'u32[]', space=smem, size = 0x4, offset = 0x4, fixed_abs, tag = 'smem constant byte address 0x4 - core index']
  #allocation1 [shape = 'u32[144,128]{1,0:T(1,128)}', space=vmem, size = 0x12000, scoped, tag = 'internal scratch']
  %s0 = inlined_call_operand.vmem [shape: bf16[64,32], index: 0, kind: input, shape index: {}]
  %s1 = inlined_call_operand.vmem [shape: f32[64,3], index: 1, kind: input, shape index: {}]
  %s2 = inlined_call_operand.vmem [shape: bf16[32,128], index: 2, kind: input, shape index: {}]
  %s3 = inlined_call_operand.vmem [shape: f32[1,128], index: 3, kind: input, shape index: {}]
  %s4 = inlined_call_operand.vmem [shape: bf16[16,32], index: 4, kind: input, shape index: {}]
  %s5 = inlined_call_operand.vmem [shape: f32[1,15], index: 5, kind: input, shape index: {}]
  %s6 = inlined_call_operand.vmem [shape: f32[1,15], index: 6, kind: input, shape index: {}]
  %s7 = inlined_call_operand.vmem [shape: bf16[15,32], index: 7, kind: input, shape index: {}]
  %s8 = inlined_call_operand.vmem [shape: f32[1,32], index: 8, kind: input, shape index: {}]
  %s9 = inlined_call_operand.vmem [shape: f32[1,32], index: 9, kind: input, shape index: {}]
  %s10 = inlined_call_operand.vmem [shape: bf16[128,64], index: 10, kind: input, shape index: {}]
  %s11 = inlined_call_operand.vmem [shape: bf16[32,64], index: 11, kind: input, shape index: {}]
  %s12 = inlined_call_operand.vmem [shape: f32[1,64], index: 12, kind: input, shape index: {}]
  %s13 = inlined_call_operand.vmem [shape: bf16[64,128], index: 13, kind: input, shape index: {}]
  %s14 = inlined_call_operand.vmem [shape: f32[1,128], index: 14, kind: input, shape index: {}]
  %s15 = inlined_call_operand.hbm [shape: f32[64,128], index: 15, kind: output, shape index: {}]
  %s16 = sld [smem:[#allocation0]]
  $region93: #{tpu_custom_call.1} parent=0
    _
  %s18 = ssub.s32 1, %s16
  %s19 = scalar_select 0, %s18, %s16
  $region1: #{tpu_custom_call.1} parent=0
    #allocation2 [shape = 'u8[32768]{0}', space=vmem, size = 0x8000, scoped, tag = 'output window, operand 0']
    #allocation3 [shape = 's32[2]{0}', space=sflag, size = 0x8, scoped, tag = 'scoped memory for tpu_custom_call.1']
    %20 = vsyncpa [#allocation3], 0
    %s21 = scalar_lea.sflag [#allocation3], 1
    %22 = vsyncpa %s21, 0
    loop: start=0, step=1, limit=4
    $region2: #{tpu_custom_call.1} parent=1 // loop_pre_header
      _
    $region3: #{tpu_custom_call.1} parent=1 // loop_header
      %s24 = sphi 0, %s28
      %p25 = scmp.ge.s32.totalorder %s24, 4
      %s34 = sphi 0, %s36
      %s37 = sphi 0, %s34
      %s38 = sphi 0, %s37
      %s54 = sphi 0, %s38
      %s60 = sphi 0, %s62
      %s63 = sphi 0, %s60
      %s64 = sphi 0, %s63
      %s80 = sphi 0, %s64
      %s84 = sphi 0, %s84
      %s86 = sphi 0, %s84
      %s87 = sphi 0, %s86
      %s101 = sphi 0, %s87
      %s105 = sphi 0, %s105
      %s107 = sphi 0, %s105
      %s108 = sphi 0, %s107
      %s122 = sphi 0, %s108
      %s126 = sphi 0, %s126
      %s128 = sphi 0, %s126
      %s129 = sphi 0, %s128
      %s143 = sphi 0, %s129
      %s147 = sphi 0, %s147
      %s149 = sphi 0, %s147
      %s150 = sphi 0, %s149
      %s164 = sphi 0, %s150
      %s168 = sphi 0, %s168
      %s170 = sphi 0, %s168
      %s171 = sphi 0, %s170
      %s185 = sphi 0, %s171
      %s189 = sphi 0, %s189
      %s191 = sphi 0, %s189
      %s192 = sphi 0, %s191
      %s206 = sphi 0, %s192
      %s210 = sphi 0, %s210
      %s212 = sphi 0, %s210
      %s213 = sphi 0, %s212
      %s227 = sphi 0, %s213
      %s231 = sphi 0, %s231
      %s233 = sphi 0, %s231
      %s234 = sphi 0, %s233
      %s248 = sphi 0, %s234
      %s252 = sphi 0, %s252
      %s254 = sphi 0, %s252
      %s255 = sphi 0, %s254
      %s269 = sphi 0, %s255
      %s273 = sphi 0, %s273
      %s275 = sphi 0, %s273
      %s276 = sphi 0, %s275
      %s290 = sphi 0, %s276
      %s294 = sphi 0, %s294
      %s296 = sphi 0, %s294
      %s297 = sphi 0, %s296
      %s311 = sphi 0, %s297
      %s315 = sphi 0, %s315
      %s317 = sphi 0, %s315
      %s318 = sphi 0, %s317
      %s332 = sphi 0, %s318
      %s336 = sphi 0, %s336
      %s338 = sphi 0, %s336
      %s339 = sphi 0, %s338
      %s353 = sphi 0, %s339
      %s359 = sphi 0, %s361
      %s362 = sphi 0, %s359
      %s363 = sphi 0, %s362
      %s379 = sphi 0, %s363
    $region4: #{tpu_custom_call.1} parent=1 // loop_header_branch
      %27 = sbr.rel (%p25) target = $region8
    $region5: #{tpu_custom_call.1} parent=1 // loop_body
      %s29 = ssub.s32 %s24, 1
      %s30 = ssub.s32 %s24, 2
      %s31 = sadd.s32 %s24, 1
      %s32 = ssub.s32 %s24, %s31
      %p33 = scmp.eq.s32.totalorder %s32, 0
      %s35 = sadd.s32 %s34, 1
      %s36 = scalar_select %p33, %s34, %s35
      %p39 = pneg %p33
      %p40 = scmp.eq.s32.totalorder %s24, 1
      %p41 = por %p39, %p40
      %p42 = scmp.ne.s32.totalorder %s34, %s37
      %p43 = scmp.eq.s32.totalorder %s24, 0
      %p44 = por %p42, %p43
      %p45 = scmp.ne.s32.totalorder %s34, %s37
      %p46 = scmp.eq.s32.totalorder %s29, 1
      %p47 = por %p45, %p46
      %p48 = scmp.ne.s32.totalorder %s37, %s38
      %p49 = scmp.eq.s32.totalorder %s29, 0
      %p50 = por %p48, %p49
      %p51 = scmp.ne.s32.totalorder %s37, %s38
      %p52 = scmp.eq.s32.totalorder %s30, 1
      %p53 = por %p51, %p52
      %p55 = scmp.ne.s32.totalorder %s38, %s54
      %p56 = scmp.eq.s32.totalorder %s30, 0
      %p57 = por %p55, %p56
      %s58 = ssub.s32 %s24, %s31
      %p59 = scmp.eq.s32.totalorder %s58, 0
      %s61 = sadd.s32 %s60, 1
      %s62 = scalar_select %p59, %s60, %s61
      %p65 = pneg %p59
      %p66 = scmp.eq.s32.totalorder %s24, 1
      %p67 = por %p65, %p66
      %p68 = scmp.ne.s32.totalorder %s60, %s63
      %p69 = scmp.eq.s32.totalorder %s24, 0
      %p70 = por %p68, %p69
      %p71 = scmp.ne.s32.totalorder %s60, %s63
      %p72 = scmp.eq.s32.totalorder %s29, 1
      %p73 = por %p71, %p72
      %p74 = scmp.ne.s32.totalorder %s63, %s64
      %p75 = scmp.eq.s32.totalorder %s29, 0
      %p76 = por %p74, %p75
      %p77 = scmp.ne.s32.totalorder %s63, %s64
      %p78 = scmp.eq.s32.totalorder %s30, 1
      %p79 = por %p77, %p78
      %p81 = scmp.ne.s32.totalorder %s64, %s80
      %p82 = scmp.eq.s32.totalorder %s30, 0
      %p83 = por %p81, %p82
      %s85 = sadd.s32 %s84, 1
      %p88 = scmp.eq.s32.totalorder %s24, 1
      %p89 = scmp.ne.s32.totalorder %s84, %s86
      %p90 = scmp.eq.s32.totalorder %s24, 0
      %p91 = por %p89, %p90
      %p92 = scmp.ne.s32.totalorder %s84, %s86
      %p93 = scmp.eq.s32.totalorder %s29, 1
      %p94 = por %p92, %p93
      %p95 = scmp.ne.s32.totalorder %s86, %s87
      %p96 = scmp.eq.s32.totalorder %s29, 0
      %p97 = por %p95, %p96
      %p98 = scmp.ne.s32.totalorder %s86, %s87
      %p99 = scmp.eq.s32.totalorder %s30, 1
      %p100 = por %p98, %p99
      %p102 = scmp.ne.s32.totalorder %s87, %s101
      %p103 = scmp.eq.s32.totalorder %s30, 0
      %p104 = por %p102, %p103
      %s106 = sadd.s32 %s105, 1
      %p109 = scmp.eq.s32.totalorder %s24, 1
      %p110 = scmp.ne.s32.totalorder %s105, %s107
      %p111 = scmp.eq.s32.totalorder %s24, 0
      %p112 = por %p110, %p111
      %p113 = scmp.ne.s32.totalorder %s105, %s107
      %p114 = scmp.eq.s32.totalorder %s29, 1
      %p115 = por %p113, %p114
      %p116 = scmp.ne.s32.totalorder %s107, %s108
      %p117 = scmp.eq.s32.totalorder %s29, 0
      %p118 = por %p116, %p117
      %p119 = scmp.ne.s32.totalorder %s107, %s108
      %p120 = scmp.eq.s32.totalorder %s30, 1
      %p121 = por %p119, %p120
      %p123 = scmp.ne.s32.totalorder %s108, %s122
      %p124 = scmp.eq.s32.totalorder %s30, 0
      %p125 = por %p123, %p124
      %s127 = sadd.s32 %s126, 1
      %p130 = scmp.eq.s32.totalorder %s24, 1
      %p131 = scmp.ne.s32.totalorder %s126, %s128
      %p132 = scmp.eq.s32.totalorder %s24, 0
      %p133 = por %p131, %p132
      %p134 = scmp.ne.s32.totalorder %s126, %s128
      %p135 = scmp.eq.s32.totalorder %s29, 1
      %p136 = por %p134, %p135
      %p137 = scmp.ne.s32.totalorder %s128, %s129
      %p138 = scmp.eq.s32.totalorder %s29, 0
      %p139 = por %p137, %p138
      %p140 = scmp.ne.s32.totalorder %s128, %s129
      %p141 = scmp.eq.s32.totalorder %s30, 1
      %p142 = por %p140, %p141
      %p144 = scmp.ne.s32.totalorder %s129, %s143
      %p145 = scmp.eq.s32.totalorder %s30, 0
      %p146 = por %p144, %p145
      %s148 = sadd.s32 %s147, 1
      %p151 = scmp.eq.s32.totalorder %s24, 1
      %p152 = scmp.ne.s32.totalorder %s147, %s149
      %p153 = scmp.eq.s32.totalorder %s24, 0
      %p154 = por %p152, %p153
      %p155 = scmp.ne.s32.totalorder %s147, %s149
      %p156 = scmp.eq.s32.totalorder %s29, 1
      %p157 = por %p155, %p156
      %p158 = scmp.ne.s32.totalorder %s149, %s150
      %p159 = scmp.eq.s32.totalorder %s29, 0
      %p160 = por %p158, %p159
      %p161 = scmp.ne.s32.totalorder %s149, %s150
      %p162 = scmp.eq.s32.totalorder %s30, 1
      %p163 = por %p161, %p162
      %p165 = scmp.ne.s32.totalorder %s150, %s164
      %p166 = scmp.eq.s32.totalorder %s30, 0
      %p167 = por %p165, %p166
      %s169 = sadd.s32 %s168, 1
      %p172 = scmp.eq.s32.totalorder %s24, 1
      %p173 = scmp.ne.s32.totalorder %s168, %s170
      %p174 = scmp.eq.s32.totalorder %s24, 0
      %p175 = por %p173, %p174
      %p176 = scmp.ne.s32.totalorder %s168, %s170
      %p177 = scmp.eq.s32.totalorder %s29, 1
      %p178 = por %p176, %p177
      %p179 = scmp.ne.s32.totalorder %s170, %s171
      %p180 = scmp.eq.s32.totalorder %s29, 0
      %p181 = por %p179, %p180
      %p182 = scmp.ne.s32.totalorder %s170, %s171
      %p183 = scmp.eq.s32.totalorder %s30, 1
      %p184 = por %p182, %p183
      %p186 = scmp.ne.s32.totalorder %s171, %s185
      %p187 = scmp.eq.s32.totalorder %s30, 0
      %p188 = por %p186, %p187
      %s190 = sadd.s32 %s189, 1
      %p193 = scmp.eq.s32.totalorder %s24, 1
      %p194 = scmp.ne.s32.totalorder %s189, %s191
      %p195 = scmp.eq.s32.totalorder %s24, 0
      %p196 = por %p194, %p195
      %p197 = scmp.ne.s32.totalorder %s189, %s191
      %p198 = scmp.eq.s32.totalorder %s29, 1
      %p199 = por %p197, %p198
      %p200 = scmp.ne.s32.totalorder %s191, %s192
      %p201 = scmp.eq.s32.totalorder %s29, 0
      %p202 = por %p200, %p201
      %p203 = scmp.ne.s32.totalorder %s191, %s192
      %p204 = scmp.eq.s32.totalorder %s30, 1
      %p205 = por %p203, %p204
      %p207 = scmp.ne.s32.totalorder %s192, %s206
      %p208 = scmp.eq.s32.totalorder %s30, 0
      %p209 = por %p207, %p208
      %s211 = sadd.s32 %s210, 1
      %p214 = scmp.eq.s32.totalorder %s24, 1
      %p215 = scmp.ne.s32.totalorder %s210, %s212
      %p216 = scmp.eq.s32.totalorder %s24, 0
      %p217 = por %p215, %p216
      %p218 = scmp.ne.s32.totalorder %s210, %s212
      %p219 = scmp.eq.s32.totalorder %s29, 1
      %p220 = por %p218, %p219
      %p221 = scmp.ne.s32.totalorder %s212, %s213
      %p222 = scmp.eq.s32.totalorder %s29, 0
      %p223 = por %p221, %p222
      %p224 = scmp.ne.s32.totalorder %s212, %s213
      %p225 = scmp.eq.s32.totalorder %s30, 1
      %p226 = por %p224, %p225
      %p228 = scmp.ne.s32.totalorder %s213, %s227
      %p229 = scmp.eq.s32.totalorder %s30, 0
      %p230 = por %p228, %p229
      %s232 = sadd.s32 %s231, 1
      %p235 = scmp.eq.s32.totalorder %s24, 1
      %p236 = scmp.ne.s32.totalorder %s231, %s233
      %p237 = scmp.eq.s32.totalorder %s24, 0
      %p238 = por %p236, %p237
      %p239 = scmp.ne.s32.totalorder %s231, %s233
      %p240 = scmp.eq.s32.totalorder %s29, 1
      %p241 = por %p239, %p240
      %p242 = scmp.ne.s32.totalorder %s233, %s234
      %p243 = scmp.eq.s32.totalorder %s29, 0
      %p244 = por %p242, %p243
      %p245 = scmp.ne.s32.totalorder %s233, %s234
      %p246 = scmp.eq.s32.totalorder %s30, 1
      %p247 = por %p245, %p246
      %p249 = scmp.ne.s32.totalorder %s234, %s248
      %p250 = scmp.eq.s32.totalorder %s30, 0
      %p251 = por %p249, %p250
      %s253 = sadd.s32 %s252, 1
      %p256 = scmp.eq.s32.totalorder %s24, 1
      %p257 = scmp.ne.s32.totalorder %s252, %s254
      %p258 = scmp.eq.s32.totalorder %s24, 0
      %p259 = por %p257, %p258
      %p260 = scmp.ne.s32.totalorder %s252, %s254
      %p261 = scmp.eq.s32.totalorder %s29, 1
      %p262 = por %p260, %p261
      %p263 = scmp.ne.s32.totalorder %s254, %s255
      %p264 = scmp.eq.s32.totalorder %s29, 0
      %p265 = por %p263, %p264
      %p266 = scmp.ne.s32.totalorder %s254, %s255
      %p267 = scmp.eq.s32.totalorder %s30, 1
      %p268 = por %p266, %p267
      %p270 = scmp.ne.s32.totalorder %s255, %s269
      %p271 = scmp.eq.s32.totalorder %s30, 0
      %p272 = por %p270, %p271
      %s274 = sadd.s32 %s273, 1
      %p277 = scmp.eq.s32.totalorder %s24, 1
      %p278 = scmp.ne.s32.totalorder %s273, %s275
      %p279 = scmp.eq.s32.totalorder %s24, 0
      %p280 = por %p278, %p279
      %p281 = scmp.ne.s32.totalorder %s273, %s275
      %p282 = scmp.eq.s32.totalorder %s29, 1
      %p283 = por %p281, %p282
      %p284 = scmp.ne.s32.totalorder %s275, %s276
      %p285 = scmp.eq.s32.totalorder %s29, 0
      %p286 = por %p284, %p285
      %p287 = scmp.ne.s32.totalorder %s275, %s276
      %p288 = scmp.eq.s32.totalorder %s30, 1
      %p289 = por %p287, %p288
      %p291 = scmp.ne.s32.totalorder %s276, %s290
      %p292 = scmp.eq.s32.totalorder %s30, 0
      %p293 = por %p291, %p292
      %s295 = sadd.s32 %s294, 1
      %p298 = scmp.eq.s32.totalorder %s24, 1
      %p299 = scmp.ne.s32.totalorder %s294, %s296
      %p300 = scmp.eq.s32.totalorder %s24, 0
      %p301 = por %p299, %p300
      %p302 = scmp.ne.s32.totalorder %s294, %s296
      %p303 = scmp.eq.s32.totalorder %s29, 1
      %p304 = por %p302, %p303
      %p305 = scmp.ne.s32.totalorder %s296, %s297
      %p306 = scmp.eq.s32.totalorder %s29, 0
      %p307 = por %p305, %p306
      %p308 = scmp.ne.s32.totalorder %s296, %s297
      %p309 = scmp.eq.s32.totalorder %s30, 1
      %p310 = por %p308, %p309
      %p312 = scmp.ne.s32.totalorder %s297, %s311
      %p313 = scmp.eq.s32.totalorder %s30, 0
      %p314 = por %p312, %p313
      %s316 = sadd.s32 %s315, 1
      %p319 = scmp.eq.s32.totalorder %s24, 1
      %p320 = scmp.ne.s32.totalorder %s315, %s317
      %p321 = scmp.eq.s32.totalorder %s24, 0
      %p322 = por %p320, %p321
      %p323 = scmp.ne.s32.totalorder %s315, %s317
      %p324 = scmp.eq.s32.totalorder %s29, 1
      %p325 = por %p323, %p324
      %p326 = scmp.ne.s32.totalorder %s317, %s318
      %p327 = scmp.eq.s32.totalorder %s29, 0
      %p328 = por %p326, %p327
      %p329 = scmp.ne.s32.totalorder %s317, %s318
      %p330 = scmp.eq.s32.totalorder %s30, 1
      %p331 = por %p329, %p330
      %p333 = scmp.ne.s32.totalorder %s318, %s332
      %p334 = scmp.eq.s32.totalorder %s30, 0
      %p335 = por %p333, %p334
      %s337 = sadd.s32 %s336, 1
      %p340 = scmp.eq.s32.totalorder %s24, 1
      %p341 = scmp.ne.s32.totalorder %s336, %s338
      %p342 = scmp.eq.s32.totalorder %s24, 0
      %p343 = por %p341, %p342
      %p344 = scmp.ne.s32.totalorder %s336, %s338
      %p345 = scmp.eq.s32.totalorder %s29, 1
      %p346 = por %p344, %p345
      %p347 = scmp.ne.s32.totalorder %s338, %s339
      %p348 = scmp.eq.s32.totalorder %s29, 0
      %p349 = por %p347, %p348
      %p350 = scmp.ne.s32.totalorder %s338, %s339
      %p351 = scmp.eq.s32.totalorder %s30, 1
      %p352 = por %p350, %p351
      %p354 = scmp.ne.s32.totalorder %s339, %s353
      %p355 = scmp.eq.s32.totalorder %s30, 0
      %p356 = por %p354, %p355
      %s357 = ssub.s32 %s24, %s31
      %p358 = scmp.eq.s32.totalorder %s357, 0
      %s360 = sadd.s32 %s359, 1
      %s361 = scalar_select %p358, %s359, %s360
      %p364 = pneg %p358
      %p365 = scmp.eq.s32.totalorder %s24, 1
      %p366 = por %p364, %p365
      %p367 = scmp.ne.s32.totalorder %s359, %s362
      %p368 = scmp.eq.s32.totalorder %s24, 0
      %p369 = por %p367, %p368
      %p370 = scmp.ne.s32.totalorder %s359, %s362
      %p371 = scmp.eq.s32.totalorder %s29, 1
      %p372 = por %p370, %p371
      %p373 = scmp.ne.s32.totalorder %s362, %s363
      %p374 = scmp.eq.s32.totalorder %s29, 0
      %p375 = por %p373, %p374
      %p376 = scmp.ne.s32.totalorder %s362, %s363
      %p377 = scmp.eq.s32.totalorder %s30, 1
      %p378 = por %p376, %p377
      %p380 = scmp.ne.s32.totalorder %s363, %s379
      %p381 = scmp.eq.s32.totalorder %s30, 0
      %p382 = por %p380, %p381
      %p383 = scmp.le.s32.totalorder 1, %s24
      %p384 = scmp.lt.s32.totalorder %s24, 3
      %p385 = pnand %p383, %p384
      %p386 = pneg %p385
      // Predicated region
      $region9: #{tpu_custom_call.1} parent=5 // pred_check
        _
      $region10: #{tpu_custom_call.1} parent=5 // pred_check_branch
        %388 = sbr.rel (%p385) target = $region12
      $region11: #{tpu_custom_call.1} parent=5 // pred_region
        %s389 = ssub.s32 %s24, 1
        // Predicated region
        $region13: #{tpu_custom_call.1} parent=11 // pred_check
          %p390 = pneg %p97
        $region14: #{tpu_custom_call.1} parent=11 // pred_check_branch
          %392 = sbr.rel (%p390) target = $region16
        $region15: #{tpu_custom_call.1} parent=11 // pred_region
          _
        $region16: #{tpu_custom_call.1} parent=11 // pred_fallthru
          _
        // Predicated region
        $region17: #{tpu_custom_call.1} parent=11 // pred_check
          %p393 = pneg %p118
        $region18: #{tpu_custom_call.1} parent=11 // pred_check_branch
          %395 = sbr.rel (%p393) target = $region20
        $region19: #{tpu_custom_call.1} parent=11 // pred_region
          _
        $region20: #{tpu_custom_call.1} parent=11 // pred_fallthru
          _
        // Predicated region
        $region21: #{tpu_custom_call.1} parent=11 // pred_check
          %p396 = pneg %p139
        $region22: #{tpu_custom_call.1} parent=11 // pred_check_branch
          %398 = sbr.rel (%p396) target = $region24
        $region23: #{tpu_custom_call.1} parent=11 // pred_region
          _
        $region24: #{tpu_custom_call.1} parent=11 // pred_fallthru
          _
        // Predicated region
        $region25: #{tpu_custom_call.1} parent=11 // pred_check
          %p399 = pneg %p160
        $region26: #{tpu_custom_call.1} parent=11 // pred_check_branch
          %401 = sbr.rel (%p399) target = $region28
        $region27: #{tpu_custom_call.1} parent=11 // pred_region
          _
        $region28: #{tpu_custom_call.1} parent=11 // pred_fallthru
          _
        // Predicated region
        $region29: #{tpu_custom_call.1} parent=11 // pred_check
          %p402 = pneg %p181
        $region30: #{tpu_custom_call.1} parent=11 // pred_check_branch
          %404 = sbr.rel (%p402) target = $region32
        $region31: #{tpu_custom_call.1} parent=11 // pred_region
          _
        $region32: #{tpu_custom_call.1} parent=11 // pred_fallthru
          _
        // Predicated region
        $region33: #{tpu_custom_call.1} parent=11 // pred_check
          %p405 = pneg %p202
        $region34: #{tpu_custom_call.1} parent=11 // pred_check_branch
          %407 = sbr.rel (%p405) target = $region36
        $region35: #{tpu_custom_call.1} parent=11 // pred_region
          _
        $region36: #{tpu_custom_call.1} parent=11 // pred_fallthru
          _
        // Predicated region
        $region37: #{tpu_custom_call.1} parent=11 // pred_check
          %p408 = pneg %p223
        $region38: #{tpu_custom_call.1} parent=11 // pred_check_branch
          %410 = sbr.rel (%p408) target = $region40
        $region39: #{tpu_custom_call.1} parent=11 // pred_region
          _
        $region40: #{tpu_custom_call.1} parent=11 // pred_fallthru
          _
        // Predicated region
        $region41: #{tpu_custom_call.1} parent=11 // pred_check
          %p411 = pneg %p244
        $region42: #{tpu_custom_call.1} parent=11 // pred_check_branch
          %413 = sbr.rel (%p411) target = $region44
        $region43: #{tpu_custom_call.1} parent=11 // pred_region
          _
        $region44: #{tpu_custom_call.1} parent=11 // pred_fallthru
          _
        // Predicated region
        $region45: #{tpu_custom_call.1} parent=11 // pred_check
          %p414 = pneg %p265
        $region46: #{tpu_custom_call.1} parent=11 // pred_check_branch
          %416 = sbr.rel (%p414) target = $region48
        $region47: #{tpu_custom_call.1} parent=11 // pred_region
          _
        $region48: #{tpu_custom_call.1} parent=11 // pred_fallthru
          _
        // Predicated region
        $region49: #{tpu_custom_call.1} parent=11 // pred_check
          %p417 = pneg %p286
        $region50: #{tpu_custom_call.1} parent=11 // pred_check_branch
          %419 = sbr.rel (%p417) target = $region52
        $region51: #{tpu_custom_call.1} parent=11 // pred_region
          _
        $region52: #{tpu_custom_call.1} parent=11 // pred_fallthru
          _
        // Predicated region
        $region53: #{tpu_custom_call.1} parent=11 // pred_check
          %p420 = pneg %p307
        $region54: #{tpu_custom_call.1} parent=11 // pred_check_branch
          %422 = sbr.rel (%p420) target = $region56
        $region55: #{tpu_custom_call.1} parent=11 // pred_region
          _
        $region56: #{tpu_custom_call.1} parent=11 // pred_fallthru
          _
        // Predicated region
        $region57: #{tpu_custom_call.1} parent=11 // pred_check
          %p423 = pneg %p328
        $region58: #{tpu_custom_call.1} parent=11 // pred_check_branch
          %425 = sbr.rel (%p423) target = $region60
        $region59: #{tpu_custom_call.1} parent=11 // pred_region
          _
        $region60: #{tpu_custom_call.1} parent=11 // pred_fallthru
          _
        // Predicated region
        $region61: #{tpu_custom_call.1} parent=11 // pred_check
          %p426 = pneg %p349
        $region62: #{tpu_custom_call.1} parent=11 // pred_check_branch
          %428 = sbr.rel (%p426) target = $region64
        $region63: #{tpu_custom_call.1} parent=11 // pred_region
          _
        $region64: #{tpu_custom_call.1} parent=11 // pred_fallthru
          _
      $region12: #{tpu_custom_call.1} parent=5 // pred_fallthru
        _
      %p429 = scmp.lt.s32.totalorder %s24, 2
      // Predicated region
      $region65: #{tpu_custom_call.1} parent=5 // pred_check
        %p430 = pneg %p429
      $region66: #{tpu_custom_call.1} parent=5 // pred_check_branch
        %432 = sbr.rel (%p430) target = $region68
      $region67: #{tpu_custom_call.1} parent=5 // pred_region
        // Predicated region
        $region69: #{tpu_custom_call.1} parent=67 // pred_check
          %p433 = pneg %p44
        $region70: #{tpu_custom_call.1} parent=67 // pred_check_branch
          %435 = sbr.rel (%p433) target = $region72
        $region71: #{tpu_custom_call.1} parent=67 // pred_region
          %s436 = smul.u32 4, %s24
          %p437 = scmp.lt.s32.totalorder %s436, 7
          %s438 = scalar_select %p437, %s436, 7
          %s439 = smul.addr %s438, 4
          %s440 = scalar_lea.vmem %s0, %s439
          %s441 = smul.u32 4, %s24
        $region72: #{tpu_custom_call.1} parent=67 // pred_fallthru
          _
        // Predicated region
        $region73: #{tpu_custom_call.1} parent=67 // pred_check
          %p442 = pneg %p70
        $region74: #{tpu_custom_call.1} parent=67 // pred_check_branch
          %444 = sbr.rel (%p442) target = $region76
        $region75: #{tpu_custom_call.1} parent=67 // pred_region
          %s445 = smul.u32 4, %s24
          %p446 = scmp.lt.s32.totalorder %s445, 7
          %s447 = scalar_select %p446, %s445, 7
          %s448 = smul.addr %s447, 8
          %s449 = scalar_lea.vmem %s1, %s448
          %s450 = smul.u32 4, %s24
        $region76: #{tpu_custom_call.1} parent=67 // pred_fallthru
          _
      $region68: #{tpu_custom_call.1} parent=5 // pred_fallthru
        _
      %p451 = scmp.le.s32.totalorder 1, %s24
      %p452 = scmp.lt.s32.totalorder %s24, 3
      %p453 = pnand %p451, %p452
      %p454 = pneg %p453
      // Predicated region
      $region77: #{tpu_custom_call.1} parent=5 // pred_check
        _
      $region78: #{tpu_custom_call.1} parent=5 // pred_check_branch
        %456 = sbr.rel (%p453) target = $region80
      $region79: #{tpu_custom_call.1} parent=5 // pred_region
        %s457 = ssub.s32 %s24, 1
        %s458 = smul.u32 4, %s29
        %p459 = scmp.lt.s32.totalorder %s458, 7
        %s460 = scalar_select %p459, %s458, 7
        %s461 = smul.addr %s460, 4
        %s462 = scalar_lea.vmem %s0, %s461
        %p463 = pneg %p50
        %p464 = pneg %p47
        %s465 = smul.u32 4, %s29
        %p466 = scmp.lt.s32.totalorder %s465, 7
        %s467 = scalar_select %p466, %s465, 7
        %s468 = smul.addr %s467, 8
        %s469 = scalar_lea.vmem %s1, %s468
        %p470 = pneg %p76
        %p471 = pneg %p73
        %p472 = pneg %p97
        %p473 = pneg %p94
        %p474 = pneg %p118
        %p475 = pneg %p115
        %p476 = pneg %p139
        %p477 = pneg %p136
        %p478 = pneg %p160
        %p479 = pneg %p157
        %p480 = pneg %p181
        %p481 = pneg %p178
        %p482 = pneg %p202
        %p483 = pneg %p199
        %p484 = pneg %p223
        %p485 = pneg %p220
        %p486 = pneg %p244
        %p487 = pneg %p241
        %p488 = pneg %p265
        %p489 = pneg %p262
        %p490 = pneg %p286
        %p491 = pneg %p283
        %p492 = pneg %p307
        %p493 = pneg %p304
        %p494 = pneg %p328
        %p495 = pneg %p325
        %p496 = pneg %p349
        %p497 = pneg %p346
        %p498 = pneg %p375
        %p499 = pneg %p372
        %s500 = sand.u32 %s362, 1
        %s501 = scalar_lea.sflag [#allocation3], %s500
        %s502 = sand.u32 %s362, 1
        %s503 = smul.addr %s502, 32
        %s504 = scalar_lea.vmem [#allocation2], %s503
        %s505 = smul.u32 4, %s29
        %p506 = scmp.lt.s32.totalorder %s505, 7
        %s507 = scalar_select %p506, %s505, 7
        %s508 = smul.addr %s507, 4
        %s509 = scalar_lea.vmem %s0, %s508
        %s510 = smul.u32 4, %s29
        %s511 = smul.u32 4, %s29
        %p512 = scmp.lt.s32.totalorder %s511, 7
        %s513 = scalar_select %p512, %s511, 7
        %s514 = smul.addr %s513, 8
        %s515 = scalar_lea.vmem %s1, %s514
        %s516 = smul.u32 4, %s29
        %s517 = smul.u32 4, %s29
        %v519 = vld [vmem:[%s509] sm:$0xf]
        %v520 = vld [vmem:[%s509 + $0x4] sm:$0xf]
        %v521 = vld [vmem:[%s509 + $0x8] sm:$0xf]
        %v522 = vld [vmem:[%s509 + $0xc] sm:$0xf]
        %v523 = vld [vmem:[%s515] sm:$0xff]
        %v524 = vld [vmem:[%s515 + $0x8] sm:$0xff]
        %v525 = vld [vmem:[%s515 + $0x10] sm:$0xff]
        %v526 = vld [vmem:[%s515 + $0x18] sm:$0xff]
        %v527 = vcvt.f32.s32.to.zero.pseudo %v523
        %v528 = vcvt.f32.s32.to.zero.pseudo %v524
        %v529 = vcvt.f32.s32.to.zero.pseudo %v525
        %v530 = vcvt.f32.s32.to.zero.pseudo %v526
        %v531 = vld [vmem:[%s2] sm:$0xf]
        %v532 = vld [vmem:[%s2 + $0x4] sm:$0xf]
        %v533 = vld [vmem:[%s2 + $0x8] sm:$0xf]
        %v534 = vld [vmem:[%s2 + $0xc] sm:$0xf]
        %v535 = vld [vmem:[%s3] sm:$0x1]
        %v537 = vlaneseq
        %v538 = vshrl.u32 %v537, 7
        %v539 = vsub.s32 0, %v538
        %v540 = vrot.slane %v535, %v539
        %v546 = vunpack.c.l.b16 %v519
        %v547 = vunpack.c.l.b16 %v520
        %v548 = vunpack.c.l.b16 %v521
        %v549 = vunpack.c.l.b16 %v522
        %v550 = vpack.c.b16 %v547, %v546
        %v551 = vpack.c.b16 %v549, %v548
        %v556 = vunpack.c.l.b16 %v531
        %v557 = vunpack.c.l.b16 %v532
        %v558 = vunpack.c.l.b16 %v533
        %v559 = vunpack.c.l.b16 %v534
        %v560 = vpack.c.b16 %v557, %v556
        %v561 = vpack.c.b16 %v559, %v558
        %vm564 = vcmask 261120
        %v566 = vsel %vm564, %v550, 0
        %v569 = vsel %vm564, %v551, 0
        %571 = vmatprep.subr.bf16.mxu0 0
        %572 = vmatpush1.bf16.msra.mxu0 %v560
        %573 = vmatprep.subr.bf16.mxu0 0
        %574 = vmatpush1.bf16.msra.mxu0 %v561
        %575 = vmatprep.subr.bf16.mxu0 0
        %576 = vmatpush1.bf16.msra.mxu0 0
        %577 = vmatprep.subr.bf16.mxu0 0
        %578 = vmatpush1.bf16.msra.mxu0 0
        %579 = vmatprep.subr.bf16.mxu0 0
        %580 = vmatpush1.bf16.msra.mxu0 0
        %581 = vmatprep.subr.bf16.mxu0 0
        %582 = vmatpush1.bf16.msra.mxu0 0
        %583 = vmatprep.subr.bf16.mxu0 0
        %584 = vmatpush1.bf16.msra.mxu0 0
        %585 = vmatprep.subr.bf16.mxu0 0
        %586 = vmatpush1.bf16.msra.mxu0 0
        %587 = vmatprep.subr.bf16.mxu0 0
        %588 = vmatpush1.bf16.msra.mxu0 0
        %589 = vmatprep.subr.bf16.mxu0 0
        %590 = vmatpush1.bf16.msra.mxu0 0
        %591 = vmatprep.subr.bf16.mxu0 0
        %592 = vmatpush1.bf16.msra.mxu0 0
        %593 = vmatprep.subr.bf16.mxu0 0
        %594 = vmatpush1.bf16.msra.mxu0 0
        %595 = vmatprep.subr.bf16.mxu0 0
        %596 = vmatpush1.bf16.msra.mxu0 0
        %597 = vmatprep.subr.bf16.mxu0 0
        %598 = vmatpush1.bf16.msra.mxu0 0
        %599 = vmatprep.subr.bf16.mxu0 0
        %600 = vmatpush1.bf16.msra.mxu0 0
        %601 = vmatprep.subr.bf16.mxu0 0
        %602 = vmatpush1.bf16.msra.mxu0 0
        %603 = vmatprep.mubr.bf16.mxu0 0
        %604 = vmatmul.mubr.bf16.gmra.mrb[0].mxu0 %v566
        %v605 = vpop.f32.mrb[0].mxu0
        %v606 = vadd.f32 %v540, %v605
        %v607 = vpop.f32.mrb[0].mxu0
        %v608 = vpop.f32.mrb[0].mxu0
        %v609 = vadd.f32 %v540, %v608
        %v610 = vpop.f32.mrb[0].mxu0
        %611 = vmatprep.mubr.bf16.mxu0 0
        %612 = vmatmul.mubr.bf16.gmra.mrb[0].mxu0 %v569
        %v613 = vpop.f32.mrb[0].mxu0
        %v614 = vadd.f32 %v540, %v613
        %v615 = vpop.f32.mrb[0].mxu0
        %v616 = vpop.f32.mrb[0].mxu0
        %v617 = vadd.f32 %v540, %v616
        %v618 = vpop.f32.mrb[0].mxu0
        %619 = vdwg.mxu0
        %v620 = vmax.f32 %v606, 0.0
        %v621 = vmax.f32 %v609, 0.0
        %v622 = vmax.f32 %v614, 0.0
        %v623 = vmax.f32 %v617, 0.0
        %v624 = vlaneseq
        %v625 = vand.u32 %v624, 127
        %626 = vset.pattern.permute.xlu0 0
        %627 = vperm.xlu0 %626, %v527
        %v628 = vpop.permute.xlu0 %627
        %629 = vset.pattern.permute.xlu0 0
        %630 = vperm.xlu0 %629, %v528
        %v631 = vpop.permute.xlu0 %630
        %632 = vset.pattern.permute.xlu0 0
        %633 = vperm.xlu0 %632, %v529
        %v634 = vpop.permute.xlu0 %633
        %635 = vset.pattern.permute.xlu0 0
        %636 = vperm.xlu0 %635, %v530
        %v637 = vpop.permute.xlu0 %636
        %vm638 = vcmp.eq.s32.totalorder %v625, %v628
        %vm639 = vcmp.eq.s32.totalorder %v625, %v631
        %vm640 = vcmp.eq.s32.totalorder %v625, %v634
        %vm641 = vcmp.eq.s32.totalorder %v625, %v637
        %v642 = vsel %vm638, 1.0, 0.0
        %v643 = vsel %vm639, 1.0, 0.0
        %v644 = vsel %vm640, 1.0, 0.0
        %v645 = vsel %vm641, 1.0, 0.0
        %v646 = vpack.c.bf16 %v643, %v642
        %v647 = vpack.c.bf16 %v645, %v644
        %v648 = vld [vmem:[%s4] sm:$0xf]
        %v649 = vld [vmem:[%s4 + $0x4] sm:$0xf]
        %v650 = vld [vmem:[%s5] sm:$0x1]
        %652 = vset.pattern.permute.xlu0 1
        %653 = vperm.xlu0 %652, %v523
        %v654 = vpop.permute.xlu0 %653
        %657 = vset.pattern.permute.xlu0 1
        %658 = vperm.xlu0 %657, %v524
        %v659 = vpop.permute.xlu0 %658
        %662 = vset.pattern.permute.xlu0 1
        %663 = vperm.xlu0 %662, %v525
        %v664 = vpop.permute.xlu0 %663
        %667 = vset.pattern.permute.xlu0 1
        %668 = vperm.xlu0 %667, %v526
        %v669 = vpop.permute.xlu0 %668
        %v672 = vlaneseq
        %v673 = vshrl.u32 %v672, 7
        %v674 = vsub.s32 0, %v673
        %v675 = vrot.slane %v650, %v674
        %v677 = vmul.f32 %v654, %v675
        %v678 = vmul.f32 %v659, %v675
        %v679 = vmul.f32 %v664, %v675
        %v680 = vmul.f32 %v669, %v675
        %v681 = vld [vmem:[%s6] sm:$0x1]
        %v683 = vlaneseq
        %v684 = vshrl.u32 %v683, 7
        %v685 = vsub.s32 0, %v684
        %v686 = vrot.slane %v681, %v685
        %v688 = vadd.f32 %v677, %v686
        %v689 = vadd.f32 %v678, %v686
        %v690 = vadd.f32 %v679, %v686
        %v691 = vadd.f32 %v680, %v686
        %v692 = vmax.f32 %v688, 0.0
        %v693 = vmax.f32 %v689, 0.0
        %v694 = vmax.f32 %v690, 0.0
        %v695 = vmax.f32 %v691, 0.0
        %v696 = vmax.f32 %v523, 0.0
        %v697 = vmax.f32 %v524, 0.0
        %v698 = vmax.f32 %v525, 0.0
        %v699 = vmax.f32 %v526, 0.0
        %v700 = vpack.c.bf16 %v693, %v692
        %v701 = vpack.c.bf16 %v695, %v694
        %v702 = vld [vmem:[%s7] sm:$0xf]
        %v703 = vld [vmem:[%s7 + $0x4] sm:$0xf]
        %v706 = vunpack.c.l.b16 %v702
        %v707 = vunpack.c.l.b16 %v703
        %v708 = vpack.c.b16 %v707, %v706
        %vm709 = vcmask 121856
        %v711 = vsel %vm709, %v700, 0
        %v714 = vsel %vm709, %v701, 0
        %vm716 = vcmask 1046528
        %vm717 = vcmask 1047552
        %v718 = vsel %vm716, 4294967295, 65535
        %v719 = vsel %vm717, %v718, 0
        %v721 = vand.u32 %v708, %v719
        %723 = vmatprep.subr.bf16.mxu0 0
        %724 = vmatpush1.bf16.msra.mxu0 %v721
        %725 = vmatprep.subr.bf16.mxu0 0
        %726 = vmatpush1.bf16.msra.mxu0 0
        %727 = vmatprep.subr.bf16.mxu0 0
        %728 = vmatpush1.bf16.msra.mxu0 0
        %729 = vmatprep.subr.bf16.mxu0 0
        %730 = vmatpush1.bf16.msra.mxu0 0
        %731 = vmatprep.subr.bf16.mxu0 0
        %732 = vmatpush1.bf16.msra.mxu0 0
        %733 = vmatprep.subr.bf16.mxu0 0
        %734 = vmatpush1.bf16.msra.mxu0 0
        %735 = vmatprep.subr.bf16.mxu0 0
        %736 = vmatpush1.bf16.msra.mxu0 0
        %737 = vmatprep.subr.bf16.mxu0 0
        %738 = vmatpush1.bf16.msra.mxu0 0
        %739 = vmatprep.subr.bf16.mxu0 0
        %740 = vmatpush1.bf16.msra.mxu0 0
        %741 = vmatprep.subr.bf16.mxu0 0
        %742 = vmatpush1.bf16.msra.mxu0 0
        %743 = vmatprep.subr.bf16.mxu0 0
        %744 = vmatpush1.bf16.msra.mxu0 0
        %745 = vmatprep.subr.bf16.mxu0 0
        %746 = vmatpush1.bf16.msra.mxu0 0
        %747 = vmatprep.subr.bf16.mxu0 0
        %748 = vmatpush1.bf16.msra.mxu0 0
        %749 = vmatprep.subr.bf16.mxu0 0
        %750 = vmatpush1.bf16.msra.mxu0 0
        %751 = vmatprep.subr.bf16.mxu0 0
        %752 = vmatpush1.bf16.msra.mxu0 0
        %753 = vmatprep.subr.bf16.mxu0 0
        %754 = vmatpush1.bf16.msra.mxu0 0
        %755 = vmatprep.mubr.bf16.mxu0 0
        %756 = vmatmul.mubr.bf16.gmra.mrb[0].mxu0 %v711
        %v757 = vpop.f32.mrb[0].mxu0
        %v758 = vadd.f32 0.0, %v757
        %v759 = vpop.f32.mrb[0].mxu0
        %v760 = vpop.f32.mrb[0].mxu0
        %v761 = vadd.f32 0.0, %v760
        %v762 = vpop.f32.mrb[0].mxu0
        %763 = vmatprep.mubr.bf16.mxu0 0
        %764 = vmatmul.mubr.bf16.gmra.mrb[0].mxu0 %v714
        %v765 = vpop.f32.mrb[0].mxu0
        %v766 = vadd.f32 0.0, %v765
        %v767 = vpop.f32.mrb[0].mxu0
        %v768 = vpop.f32.mrb[0].mxu0
        %v769 = vadd.f32 0.0, %v768
        %v770 = vpop.f32.mrb[0].mxu0
        %771 = vdwg.mxu0
        %v774 = vunpack.c.l.b16 %v648
        %v775 = vunpack.c.l.b16 %v649
        %v776 = vpack.c.b16 %v775, %v774
        %vm778 = vcmask 130048
        %v780 = vsel %vm778, %v646, 0
        %v783 = vsel %vm778, %v647, 0
        %785 = vmatprep.subr.bf16.mxu0 0
        %786 = vmatpush1.bf16.msra.mxu0 %v776
        %787 = vmatprep.subr.bf16.mxu0 0
        %788 = vmatpush1.bf16.msra.mxu0 0
        %789 = vmatprep.subr.bf16.mxu0 0
        %790 = vmatpush1.bf16.msra.mxu0 0
        %791 = vmatprep.subr.bf16.mxu0 0
        %792 = vmatpush1.bf16.msra.mxu0 0
        %793 = vmatprep.subr.bf16.mxu0 0
        %794 = vmatpush1.bf16.msra.mxu0 0
        %795 = vmatprep.subr.bf16.mxu0 0
        %796 = vmatpush1.bf16.msra.mxu0 0
        %797 = vmatprep.subr.bf16.mxu0 0
        %798 = vmatpush1.bf16.msra.mxu0 0
        %799 = vmatprep.subr.bf16.mxu0 0
        %800 = vmatpush1.bf16.msra.mxu0 0
        %801 = vmatprep.subr.bf16.mxu0 0
        %802 = vmatpush1.bf16.msra.mxu0 0
        %803 = vmatprep.subr.bf16.mxu0 0
        %804 = vmatpush1.bf16.msra.mxu0 0
        %805 = vmatprep.subr.bf16.mxu0 0
        %806 = vmatpush1.bf16.msra.mxu0 0
        %807 = vmatprep.subr.bf16.mxu0 0
        %808 = vmatpush1.bf16.msra.mxu0 0
        %809 = vmatprep.subr.bf16.mxu0 0
        %810 = vmatpush1.bf16.msra.mxu0 0
        %811 = vmatprep.subr.bf16.mxu0 0
        %812 = vmatpush1.bf16.msra.mxu0 0
        %813 = vmatprep.subr.bf16.mxu0 0
        %814 = vmatpush1.bf16.msra.mxu0 0
        %815 = vmatprep.subr.bf16.mxu0 0
        %816 = vmatpush1.bf16.msra.mxu0 0
        %817 = vmatprep.mubr.bf16.mxu0 0
        %818 = vmatmul.mubr.bf16.gmra.mrb[0].mxu0 %v780
        %v819 = vpop.f32.mrb[0].mxu0
        %v820 = vadd.f32 %v758, %v819
        %v821 = vpop.f32.mrb[0].mxu0
        %v822 = vpop.f32.mrb[0].mxu0
        %v823 = vadd.f32 %v761, %v822
        %v824 = vpop.f32.mrb[0].mxu0
        %825 = vmatprep.mubr.bf16.mxu0 0
        %826 = vmatmul.mubr.bf16.gmra.mrb[0].mxu0 %v783
        %v827 = vpop.f32.mrb[0].mxu0
        %v828 = vadd.f32 %v766, %v827
        %v829 = vpop.f32.mrb[0].mxu0
        %v830 = vpop.f32.mrb[0].mxu0
        %v831 = vadd.f32 %v769, %v830
        %v832 = vpop.f32.mrb[0].mxu0
        %833 = vdwg.mxu0
        %v834 = vld [vmem:[%s8] sm:$0x1]
        %836 = vset.pattern.permute.xlu0 2
        %837 = vperm.xlu0 %836, %v696
        %v838 = vpop.permute.xlu0 %837
        %841 = vset.pattern.permute.xlu0 2
        %842 = vperm.xlu0 %841, %v697
        %v843 = vpop.permute.xlu0 %842
        %846 = vset.pattern.permute.xlu0 2
        %847 = vperm.xlu0 %846, %v698
        %v848 = vpop.permute.xlu0 %847
        %851 = vset.pattern.permute.xlu0 2
        %852 = vperm.xlu0 %851, %v699
        %v853 = vpop.permute.xlu0 %852
        %v856 = vlaneseq
        %v857 = vshrl.u32 %v856, 7
        %v858 = vsub.s32 0, %v857
        %v859 = vrot.slane %v834, %v858
        %v861 = vmul.f32 %v838, %v859
        %v862 = vmul.f32 %v843, %v859
        %v863 = vmul.f32 %v848, %v859
        %v864 = vmul.f32 %v853, %v859
        %v865 = vadd.f32 %v820, %v861
        %v866 = vadd.f32 %v823, %v862
        %v867 = vadd.f32 %v828, %v863
        %v868 = vadd.f32 %v831, %v864
        %v869 = vld [vmem:[%s9] sm:$0x1]
        %v871 = vlaneseq
        %v872 = vshrl.u32 %v871, 7
        %v873 = vsub.s32 0, %v872
        %v874 = vrot.slane %v869, %v873
        %v876 = vadd.f32 %v865, %v874
        %v877 = vadd.f32 %v866, %v874
        %v878 = vadd.f32 %v867, %v874
        %v879 = vadd.f32 %v868, %v874
        %v880 = vmax.f32 %v876, 0.0
        %v881 = vmax.f32 %v877, 0.0
        %v882 = vmax.f32 %v878, 0.0
        %v883 = vmax.f32 %v879, 0.0
        %v884 = vpack.c.bf16 %v621, %v620
        %v885 = vpack.c.bf16 %v623, %v622
        %v886 = vld [vmem:[%s10] sm:$0xf]
        %v887 = vld [vmem:[%s10 + $0x4] sm:$0xf]
        %v888 = vld [vmem:[%s10 + $0x8] sm:$0xf]
        %v889 = vld [vmem:[%s10 + $0xc] sm:$0xf]
        %v890 = vld [vmem:[%s10 + $0x10] sm:$0xf]
        %v891 = vld [vmem:[%s10 + $0x14] sm:$0xf]
        %v892 = vld [vmem:[%s10 + $0x18] sm:$0xf]
        %v893 = vld [vmem:[%s10 + $0x1c] sm:$0xf]
        %v894 = vld [vmem:[%s10 + $0x20] sm:$0xf]
        %v895 = vld [vmem:[%s10 + $0x24] sm:$0xf]
        %v896 = vld [vmem:[%s10 + $0x28] sm:$0xf]
        %v897 = vld [vmem:[%s10 + $0x2c] sm:$0xf]
        %v898 = vld [vmem:[%s10 + $0x30] sm:$0xf]
        %v899 = vld [vmem:[%s10 + $0x34] sm:$0xf]
        %v900 = vld [vmem:[%s10 + $0x38] sm:$0xf]
        %v901 = vld [vmem:[%s10 + $0x3c] sm:$0xf]
        %v902 = vpack.c.bf16 %v881, %v880
        %v903 = vpack.c.bf16 %v883, %v882
        %v904 = vld [vmem:[%s11] sm:$0xf]
        %v905 = vld [vmem:[%s11 + $0x4] sm:$0xf]
        %v906 = vld [vmem:[%s11 + $0x8] sm:$0xf]
        %v907 = vld [vmem:[%s11 + $0xc] sm:$0xf]
        %v912 = vunpack.c.l.b16 %v904
        %v913 = vunpack.c.l.b16 %v905
        %v914 = vunpack.c.l.b16 %v906
        %v915 = vunpack.c.l.b16 %v907
        %v916 = vpack.c.b16 %v913, %v912
        %v917 = vpack.c.b16 %v915, %v914
        %v921 = vsel %vm564, %v902, 0
        %v924 = vsel %vm564, %v903, 0
        %926 = vmatprep.subr.bf16.mxu0 0
        %927 = vmatpush1.bf16.msra.mxu0 %v916
        %928 = vmatprep.subr.bf16.mxu0 0
        %929 = vmatpush1.bf16.msra.mxu0 %v917
        %930 = vmatprep.subr.bf16.mxu0 0
        %931 = vmatpush1.bf16.msra.mxu0 0
        %932 = vmatprep.subr.bf16.mxu0 0
        %933 = vmatpush1.bf16.msra.mxu0 0
        %934 = vmatprep.subr.bf16.mxu0 0
        %935 = vmatpush1.bf16.msra.mxu0 0
        %936 = vmatprep.subr.bf16.mxu0 0
        %937 = vmatpush1.bf16.msra.mxu0 0
        %938 = vmatprep.subr.bf16.mxu0 0
        %939 = vmatpush1.bf16.msra.mxu0 0
        %940 = vmatprep.subr.bf16.mxu0 0
        %941 = vmatpush1.bf16.msra.mxu0 0
        %942 = vmatprep.subr.bf16.mxu0 0
        %943 = vmatpush1.bf16.msra.mxu0 0
        %944 = vmatprep.subr.bf16.mxu0 0
        %945 = vmatpush1.bf16.msra.mxu0 0
        %946 = vmatprep.subr.bf16.mxu0 0
        %947 = vmatpush1.bf16.msra.mxu0 0
        %948 = vmatprep.subr.bf16.mxu0 0
        %949 = vmatpush1.bf16.msra.mxu0 0
        %950 = vmatprep.subr.bf16.mxu0 0
        %951 = vmatpush1.bf16.msra.mxu0 0
        %952 = vmatprep.subr.bf16.mxu0 0
        %953 = vmatpush1.bf16.msra.mxu0 0
        %954 = vmatprep.subr.bf16.mxu0 0
        %955 = vmatpush1.bf16.msra.mxu0 0
        %956 = vmatprep.subr.bf16.mxu0 0
        %957 = vmatpush1.bf16.msra.mxu0 0
        %958 = vmatprep.mubr.bf16.mxu0 0
        %959 = vmatmul.mubr.bf16.gmra.mrb[0].mxu0 %v921
        %v960 = vpop.f32.mrb[0].mxu0
        %v961 = vadd.f32 0.0, %v960
        %v962 = vpop.f32.mrb[0].mxu0
        %v963 = vpop.f32.mrb[0].mxu0
        %v964 = vadd.f32 0.0, %v963
        %v965 = vpop.f32.mrb[0].mxu0
        %966 = vmatprep.mubr.bf16.mxu0 0
        %967 = vmatmul.mubr.bf16.gmra.mrb[0].mxu0 %v924
        %v968 = vpop.f32.mrb[0].mxu0
        %v969 = vadd.f32 0.0, %v968
        %v970 = vpop.f32.mrb[0].mxu0
        %v971 = vpop.f32.mrb[0].mxu0
        %v972 = vadd.f32 0.0, %v971
        %v973 = vpop.f32.mrb[0].mxu0
        %974 = vdwg.mxu0
        %v991 = vunpack.c.l.b16 %v886
        %v992 = vunpack.c.l.b16 %v887
        %v993 = vunpack.c.l.b16 %v888
        %v994 = vunpack.c.l.b16 %v889
        %v995 = vunpack.c.l.b16 %v890
        %v996 = vunpack.c.l.b16 %v891
        %v997 = vunpack.c.l.b16 %v892
        %v998 = vunpack.c.l.b16 %v893
        %v999 = vunpack.c.l.b16 %v894
        %v1000 = vunpack.c.l.b16 %v895
        %v1001 = vunpack.c.l.b16 %v896
        %v1002 = vunpack.c.l.b16 %v897
        %v1003 = vunpack.c.l.b16 %v898
        %v1004 = vunpack.c.l.b16 %v899
        %v1005 = vunpack.c.l.b16 %v900
        %v1006 = vunpack.c.l.b16 %v901
        %v1007 = vpack.c.b16 %v992, %v991
        %v1008 = vpack.c.b16 %v994, %v993
        %v1009 = vpack.c.b16 %v996, %v995
        %v1010 = vpack.c.b16 %v998, %v997
        %v1011 = vpack.c.b16 %v1000, %v999
        %v1012 = vpack.c.b16 %v1002, %v1001
        %v1013 = vpack.c.b16 %v1004, %v1003
        %v1014 = vpack.c.b16 %v1006, %v1005
        %1023 = vmatprep.subr.bf16.mxu0 0
        %1024 = vmatpush1.bf16.msra.mxu0 %v1007
        %1025 = vmatprep.subr.bf16.mxu0 0
        %1026 = vmatpush1.bf16.msra.mxu0 %v1008
        %1027 = vmatprep.subr.bf16.mxu0 0
        %1028 = vmatpush1.bf16.msra.mxu0 %v1009
        %1029 = vmatprep.subr.bf16.mxu0 0
        %1030 = vmatpush1.bf16.msra.mxu0 %v1010
        %1031 = vmatprep.subr.bf16.mxu0 0
        %1032 = vmatpush1.bf16.msra.mxu0 %v1011
        %1033 = vmatprep.subr.bf16.mxu0 0
        %1034 = vmatpush1.bf16.msra.mxu0 %v1012
        %1035 = vmatprep.subr.bf16.mxu0 0
        %1036 = vmatpush1.bf16.msra.mxu0 %v1013
        %1037 = vmatprep.subr.bf16.mxu0 0
        %1038 = vmatpush1.bf16.msra.mxu0 %v1014
        %1039 = vmatprep.subr.bf16.mxu0 0
        %1040 = vmatpush1.bf16.msra.mxu0 0
        %1041 = vmatprep.subr.bf16.mxu0 0
        %1042 = vmatpush1.bf16.msra.mxu0 0
        %1043 = vmatprep.subr.bf16.mxu0 0
        %1044 = vmatpush1.bf16.msra.mxu0 0
        %1045 = vmatprep.subr.bf16.mxu0 0
        %1046 = vmatpush1.bf16.msra.mxu0 0
        %1047 = vmatprep.subr.bf16.mxu0 0
        %1048 = vmatpush1.bf16.msra.mxu0 0
        %1049 = vmatprep.subr.bf16.mxu0 0
        %1050 = vmatpush1.bf16.msra.mxu0 0
        %1051 = vmatprep.subr.bf16.mxu0 0
        %1052 = vmatpush1.bf16.msra.mxu0 0
        %1053 = vmatprep.subr.bf16.mxu0 0
        %1054 = vmatpush1.bf16.msra.mxu0 0
        %1055 = vmatprep.mubr.bf16.mxu0 0
        %1056 = vmatmul.mubr.bf16.gmra.mrb[0].mxu0 %v884
        %v1057 = vpop.f32.mrb[0].mxu0
        %v1058 = vadd.f32 %v961, %v1057
        %v1059 = vpop.f32.mrb[0].mxu0
        %v1060 = vpop.f32.mrb[0].mxu0
        %v1061 = vadd.f32 %v964, %v1060
        %v1062 = vpop.f32.mrb[0].mxu0
        %1063 = vmatprep.mubr.bf16.mxu0 0
        %1064 = vmatmul.mubr.bf16.gmra.mrb[0].mxu0 %v885
        %v1065 = vpop.f32.mrb[0].mxu0
        %v1066 = vadd.f32 %v969, %v1065
        %v1067 = vpop.f32.mrb[0].mxu0
        %v1068 = vpop.f32.mrb[0].mxu0
        %v1069 = vadd.f32 %v972, %v1068
        %v1070 = vpop.f32.mrb[0].mxu0
        %1071 = vdwg.mxu0
        %v1072 = vld [vmem:[%s12] sm:$0x1]
        %v1074 = vlaneseq
        %v1075 = vshrl.u32 %v1074, 7
        %v1076 = vsub.s32 0, %v1075
        %v1077 = vrot.slane %v1072, %v1076
        %v1079 = vadd.f32 %v1058, %v1077
        %v1080 = vadd.f32 %v1061, %v1077
        %v1081 = vadd.f32 %v1066, %v1077
        %v1082 = vadd.f32 %v1069, %v1077
        %v1083 = vmax.f32 %v1079, 0.0
        %v1084 = vmax.f32 %v1080, 0.0
        %v1085 = vmax.f32 %v1081, 0.0
        %v1086 = vmax.f32 %v1082, 0.0
        %v1087 = vpack.c.bf16 %v1084, %v1083
        %v1088 = vpack.c.bf16 %v1086, %v1085
        %v1089 = vld [vmem:[%s13] sm:$0xf]
        %v1090 = vld [vmem:[%s13 + $0x4] sm:$0xf]
        %v1091 = vld [vmem:[%s13 + $0x8] sm:$0xf]
        %v1092 = vld [vmem:[%s13 + $0xc] sm:$0xf]
        %v1093 = vld [vmem:[%s13 + $0x10] sm:$0xf]
        %v1094 = vld [vmem:[%s13 + $0x14] sm:$0xf]
        %v1095 = vld [vmem:[%s13 + $0x18] sm:$0xf]
        %v1096 = vld [vmem:[%s13 + $0x1c] sm:$0xf]
        %v1097 = vld [vmem:[%s14] sm:$0x1]
        %v1099 = vlaneseq
        %v1100 = vshrl.u32 %v1099, 7
        %v1101 = vsub.s32 0, %v1100
        %v1102 = vrot.slane %v1097, %v1101
        %v1112 = vunpack.c.l.b16 %v1089
        %v1113 = vunpack.c.l.b16 %v1090
        %v1114 = vunpack.c.l.b16 %v1091
        %v1115 = vunpack.c.l.b16 %v1092
        %v1116 = vunpack.c.l.b16 %v1093
        %v1117 = vunpack.c.l.b16 %v1094
        %v1118 = vunpack.c.l.b16 %v1095
        %v1119 = vunpack.c.l.b16 %v1096
        %v1120 = vpack.c.b16 %v1113, %v1112
        %v1121 = vpack.c.b16 %v1115, %v1114
        %v1122 = vpack.c.b16 %v1117, %v1116
        %v1123 = vpack.c.b16 %v1119, %v1118
        %vm1128 = vcmask 523264
        %v1130 = vsel %vm1128, %v1087, 0
        %v1133 = vsel %vm1128, %v1088, 0
        %1135 = vmatprep.subr.bf16.mxu0 0
        %1136 = vmatpush1.bf16.msra.mxu0 %v1120
        %1137 = vmatprep.subr.bf16.mxu0 0
        %1138 = vmatpush1.bf16.msra.mxu0 %v1121
        %1139 = vmatprep.subr.bf16.mxu0 0
        %1140 = vmatpush1.bf16.msra.mxu0 %v1122
        %1141 = vmatprep.subr.bf16.mxu0 0
        %1142 = vmatpush1.bf16.msra.mxu0 %v1123
        %1143 = vmatprep.subr.bf16.mxu0 0
        %1144 = vmatpush1.bf16.msra.mxu0 0
        %1145 = vmatprep.subr.bf16.mxu0 0
        %1146 = vmatpush1.bf16.msra.mxu0 0
        %1147 = vmatprep.subr.bf16.mxu0 0
        %1148 = vmatpush1.bf16.msra.mxu0 0
        %1149 = vmatprep.subr.bf16.mxu0 0
        %1150 = vmatpush1.bf16.msra.mxu0 0
        %1151 = vmatprep.subr.bf16.mxu0 0
        %1152 = vmatpush1.bf16.msra.mxu0 0
        %1153 = vmatprep.subr.bf16.mxu0 0
        %1154 = vmatpush1.bf16.msra.mxu0 0
        %1155 = vmatprep.subr.bf16.mxu0 0
        %1156 = vmatpush1.bf16.msra.mxu0 0
        %1157 = vmatprep.subr.bf16.mxu0 0
        %1158 = vmatpush1.bf16.msra.mxu0 0
        %1159 = vmatprep.subr.bf16.mxu0 0
        %1160 = vmatpush1.bf16.msra.mxu0 0
        %1161 = vmatprep.subr.bf16.mxu0 0
        %1162 = vmatpush1.bf16.msra.mxu0 0
        %1163 = vmatprep.subr.bf16.mxu0 0
        %1164 = vmatpush1.bf16.msra.mxu0 0
        %1165 = vmatprep.subr.bf16.mxu0 0
        %1166 = vmatpush1.bf16.msra.mxu0 0
        %1167 = vmatprep.mubr.bf16.mxu0 0
        %1168 = vmatmul.mubr.bf16.gmra.mrb[0].mxu0 %v1130
        %v1169 = vpop.f32.mrb[0].mxu0
        %v1170 = vadd.f32 %v1102, %v1169
        %v1171 = vpop.f32.mrb[0].mxu0
        %v1172 = vpop.f32.mrb[0].mxu0
        %v1173 = vadd.f32 %v1102, %v1172
        %v1174 = vpop.f32.mrb[0].mxu0
        %1175 = vmatprep.mubr.bf16.mxu0 0
        %1176 = vmatmul.mubr.bf16.gmra.mrb[0].mxu0 %v1133
        %v1177 = vpop.f32.mrb[0].mxu0
        %v1178 = vadd.f32 %v1102, %v1177
        %v1179 = vpop.f32.mrb[0].mxu0
        %v1180 = vpop.f32.mrb[0].mxu0
        %v1181 = vadd.f32 %v1102, %v1180
        %v1182 = vpop.f32.mrb[0].mxu0
        %1183 = vdwg.mxu0
        %1184 = vst [vmem:[%s504] sm:$0xff] %v1170
        %1185 = vst [vmem:[%s504 + $0x8] sm:$0xff] %v1173
        %1186 = vst [vmem:[%s504 + $0x10] sm:$0xff] %v1178
        %1187 = vst [vmem:[%s504 + $0x18] sm:$0xff] %v1181
        %s1188 = sand.u32 %s362, 1
        %s1189 = scalar_lea.sflag [#allocation3], %s1188
        %s1190 = sand.u32 %s362, 1
        %s1191 = smul.addr %s1190, 32
        %s1192 = scalar_lea.vmem [#allocation2], %s1191
        // Predicated region
        $region81: #{tpu_custom_call.1} parent=79 // pred_check
          %p1193 = pneg %p372
        $region82: #{tpu_custom_call.1} parent=79 // pred_check_branch
          %1195 = sbr.rel (%p1193) target = $region84
        $region83: #{tpu_custom_call.1} parent=79 // pred_region
          %s1196 = smul.u32 4, %s29
          %s1198 = ssub.s32 512, 512
          %1199 = vsyncadd %s1189, %s1198
          %s1200 = smul.addr %s1196, 128
          %s1201 = scalar_lea.hbm %s15, %s1200
          %s1202 = sshll.u32 %s1192, 4
          %s1203 = int_to_ptr.vmem [resolvable:$true] %s1202
          %1208 = dma.vmem_to_hbm [thread:$0]  %s1203, 512, %s1201, %s1189, 128, 128, 8
        $region84: #{tpu_custom_call.1} parent=79 // pred_fallthru
          _
      $region80: #{tpu_custom_call.1} parent=5 // pred_fallthru
        _
      %p1209 = scmp.le.s32.totalorder 2, %s24
      // Predicated region
      $region85: #{tpu_custom_call.1} parent=5 // pred_check
        %p1210 = pneg %p1209
      $region86: #{tpu_custom_call.1} parent=5 // pred_check_branch
        %1212 = sbr.rel (%p1210) target = $region88
      $region87: #{tpu_custom_call.1} parent=5 // pred_region
        %s1213 = ssub.s32 %s24, 2
        // Predicated region
        $region89: #{tpu_custom_call.1} parent=87 // pred_check
          %p1214 = pneg %p378
        $region90: #{tpu_custom_call.1} parent=87 // pred_check_branch
          %1216 = sbr.rel (%p1214) target = $region92
        $region91: #{tpu_custom_call.1} parent=87 // pred_region
          %s1217 = sand.u32 %s363, 1
          %s1218 = scalar_lea.sflag [#allocation3], %s1217
          %s1219 = sand.u32 %s363, 1
          %s1220 = smul.addr %s1219, 32
          %s1221 = scalar_lea.vmem [#allocation2], %s1220
          %1222 = dma.done %s1218, 512
        $region92: #{tpu_custom_call.1} parent=87 // pred_fallthru
          _
      $region88: #{tpu_custom_call.1} parent=5 // pred_fallthru
        _
    $region6: #{tpu_custom_call.1} parent=1 // loop_footer
      %s28 = sadd.s32 1, %s24
    $region7: #{tpu_custom_call.1} parent=1 // loop_footer_branch
      %23 = sbr.rel target = $region3
    $region8: #{tpu_custom_call.1} parent=1 // loop_exit
      _
    %1223 = vsyncpa [#allocation3], 1
    %s1224 = scalar_lea.sflag [#allocation3], 1
    %1225 = vsyncpa %s1224, 1

</llo_original>
